<compile_context>
chip_gen: v7x
topology: tpu7x:2x2x1
jax: 0.10.0
libtpu: 0.0.40
codegen_flags: <defaults>
</compile_context>

<pallas_src>
import math

import jax
import jax.numpy as jnp
from jax.experimental import pallas as pl
from jax.experimental.pallas import tpu as pltpu


def _attn_kernel(x_ref, ctx_ref, mask_ref,
                 w_in_ref, b_in_ref, w_out_ref, b_out_ref,
                 ct_ref, wts_ref):
    # Per-grid-step: TB batch rows.
    x = x_ref[...]                     # (TB, H)
    ctx = ctx_ref[...]                 # (TB, T, H)
    mask = mask_ref[...]               # (TB, T)

    # gamma_h = linear_in(x)                              -> (TB, H)  (MXU)
    gamma = jnp.dot(x, w_in_ref[...],
                    preferred_element_type=jnp.float32) + b_in_ref[...]

    # scores = bmm(context, gamma_h).squeeze(2) + mask    -> (TB, T)
    # broadcast-multiply + cross-lane reduce over H (VPU + XLU), keeps MXU free.
    scores = jnp.sum(ctx * gamma[:, None, :], axis=-1) + mask

    # softmax over T (lane axis), f32 math
    m = jnp.max(scores, axis=-1, keepdims=True)
    e = jnp.exp(scores - m)
    denom = jnp.sum(e, axis=-1, keepdims=True)
    weights = e * pl.reciprocal(denom, approx=True)       # (TB, T)

    # c_t = bmm(weights.unsqueeze(1), context).squeeze(1) -> (TB, H)
    # broadcast-multiply + sublane reduce over T.
    c_t = jnp.sum(weights[:, :, None] * ctx, axis=1)

    # c_t = linear_out(c_t)                               -> (TB, H)  (MXU)
    out = jnp.dot(c_t, w_out_ref[...],
                  preferred_element_type=jnp.float32) + b_out_ref[...]

    ct_ref[...] = out.astype(ct_ref.dtype)
    wts_ref[...] = weights.astype(wts_ref.dtype)


def _choose_tb(B, T, H, itemsize, vmem_budget=64 << 20):
    """Pick a batch tile: big enough to fill the MXU, small enough for VMEM."""
    # Keep the double-buffered context tile (2 * TB*T*H*itemsize) well under
    # the VMEM budget (use ~1/4 of it for the context input stream).
    max_rows = max(1, (vmem_budget // 4) // max(1, 2 * T * H * itemsize))
    tb = min(B, 256, max_rows)
    if tb >= B:
        return B                      # single grid step; block == full array
    return max(8, (tb // 8) * 8)      # tiled batch dim must be a multiple of 8


def global_attention_pallas(x, context, mask, w_in_t, b_in, w_out_t, b_out):
    """x: (B,H), context: (B,T,H), mask: (B,T). Returns (c_t (B,H), weights (B,T))."""
    B, H = x.shape
    _, T, _ = context.shape

    tb = _choose_tb(B, T, H, x.dtype.itemsize)
    n_blocks = pl.cdiv(B, tb)
    B_pad = n_blocks * tb

    if B_pad != B:
        pad = B_pad - B
        x = jnp.pad(x, ((0, pad), (0, 0)))
        context = jnp.pad(context, ((0, pad), (0, 0), (0, 0)))
        mask = jnp.pad(mask, ((0, pad), (0, 0)))

    b_in2 = b_in.reshape(1, H)
    b_out2 = b_out.reshape(1, H)

    grid_spec = pltpu.PrefetchScalarGridSpec(
        num_scalar_prefetch=0,
        grid=(n_blocks,),
        in_specs=[
            pl.BlockSpec((tb, H), lambda b: (b, 0)),        # x
            pl.BlockSpec((tb, T, H), lambda b: (b, 0, 0)),  # context
            pl.BlockSpec((tb, T), lambda b: (b, 0)),        # mask
            pl.BlockSpec((H, H), lambda b: (0, 0)),         # W_in^T (constant)
            pl.BlockSpec((1, H), lambda b: (0, 0)),         # b_in
            pl.BlockSpec((H, H), lambda b: (0, 0)),         # W_out^T (constant)
            pl.BlockSpec((1, H), lambda b: (0, 0)),         # b_out
        ],
        out_specs=[
            pl.BlockSpec((tb, H), lambda b: (b, 0)),        # c_t
            pl.BlockSpec((tb, T), lambda b: (b, 0)),        # weights
        ],
    )

    c_t, weights = pl.pallas_call(
        _attn_kernel,
        out_shape=(
            jax.ShapeDtypeStruct((B_pad, H), x.dtype),
            jax.ShapeDtypeStruct((B_pad, T), x.dtype),
        ),
        grid_spec=grid_spec,
        compiler_params=pltpu.CompilerParams(
            dimension_semantics=("parallel",),
            vmem_limit_bytes=64 << 20,
        ),
    )(x, context, mask, w_in_t, b_in2, w_out_t, b_out2)

    if B_pad != B:
        c_t = c_t[:B]
        weights = weights[:B]
    return c_t, weights


def _reference(x, context, mask, w_in_t, b_in, w_out_t, b_out):
    gamma = x @ w_in_t + b_in                                    # (B, H)
    scores = jnp.einsum("bth,bh->bt", context, gamma) + mask     # (B, T)
    weights = jax.nn.softmax(scores, axis=1)
    c_t = jnp.einsum("bt,bth->bh", weights, context)
    c_t = c_t @ w_out_t + b_out
    return c_t, weights


if __name__ == "__main__":
    B, T, H = 2, 8, 32
    key = jax.random.PRNGKey(0)
    kx, kc, km, kwi, kwo = jax.random.split(key, 5)

    x = jax.random.normal(kx, (B, H), dtype=jnp.float32)
    context = jax.random.normal(kc, (B, T, H), dtype=jnp.float32)
    # additive mask, e.g. 0 for valid and -1e9 for padded positions
    mask = jnp.where(jax.random.uniform(km, (B, T)) < 0.8, 0.0, -1e9).astype(jnp.float32)

    # Deterministic parameter init mimicking the module's __init__:
    # kaiming_normal_ for weights (std = sqrt(2 / fan_in)), zeros for biases.
    std = math.sqrt(2.0 / H)
    W_in = std * jax.random.normal(kwi, (H, H), dtype=jnp.float32)   # (out, in)
    W_out = std * jax.random.normal(kwo, (H, H), dtype=jnp.float32)  # (out, in)
    b_in = jnp.zeros((H,), dtype=jnp.float32)
    b_out = jnp.zeros((H,), dtype=jnp.float32)

    # pre-transpose to (in, out) for x @ W^T form
    w_in_t = W_in.T
    w_out_t = W_out.T

    c_t, weights = global_attention_pallas(x, context, mask, w_in_t, b_in, w_out_t, b_out)
    jax.block_until_ready((c_t, weights))

    c_ref, w_ref = _reference(x, context, mask, w_in_t, b_in, w_out_t, b_out)
    assert jnp.allclose(c_t, c_ref, rtol=1e-2, atol=1e-2)
    assert jnp.allclose(weights, w_ref, rtol=1e-2, atol=1e-2)

    print("KERNEL_OK")
</pallas_src>

<mosaic_0001>
module attributes {stable_mosaic.version = 11 : i64} {
  func.func @_attn_kernel(%arg0: i32, %arg1: memref<2x32xf32, #tpu.memory_space<vmem>>, %arg2: memref<2x8x32xf32, #tpu.memory_space<vmem>>, %arg3: memref<2x8xf32, #tpu.memory_space<vmem>>, %arg4: memref<32x32xf32, #tpu.memory_space<vmem>>, %arg5: memref<1x32xf32, #tpu.memory_space<vmem>>, %arg6: memref<32x32xf32, #tpu.memory_space<vmem>>, %arg7: memref<1x32xf32, #tpu.memory_space<vmem>>, %arg8: memref<2x32xf32, #tpu.memory_space<vmem>>, %arg9: memref<2x8xf32, #tpu.memory_space<vmem>>) attributes {dimension_semantics = [#tpu.dimension_semantics<parallel>], iteration_bounds = array<i64: 1>, scalar_prefetch = 0 : i64, scratch_operands = 0 : i64, tpu.core_type = #tpu.core_type<tc>, window_params = [{transform_indices = @transform_0, window_bounds = array<i64: 2, 32>}, {transform_indices = @transform_1, window_bounds = array<i64: 2, 8, 32>}, {transform_indices = @transform_2, window_bounds = array<i64: 2, 8>}, {pipeline_mode = #tpu.pipeline_mode<synchronous>, transform_indices = @transform_3, window_bounds = array<i64: 32, 32>}, {pipeline_mode = #tpu.pipeline_mode<synchronous>, transform_indices = @transform_4, window_bounds = array<i64: 1, 32>}, {pipeline_mode = #tpu.pipeline_mode<synchronous>, transform_indices = @transform_5, window_bounds = array<i64: 32, 32>}, {pipeline_mode = #tpu.pipeline_mode<synchronous>, transform_indices = @transform_6, window_bounds = array<i64: 1, 32>}, {transform_indices = @transform_7, window_bounds = array<i64: 2, 32>}, {transform_indices = @transform_8, window_bounds = array<i64: 2, 8>}]} {
    %c0 = arith.constant 0 : index
    %c0_0 = arith.constant 0 : index
    %0 = vector.load %arg1[%c0, %c0_0] : memref<2x32xf32, #tpu.memory_space<vmem>>, vector<2x32xf32>
    %c0_1 = arith.constant 0 : index
    %c0_2 = arith.constant 0 : index
    %c0_3 = arith.constant 0 : index
    %1 = vector.load %arg2[%c0_1, %c0_2, %c0_3] : memref<2x8x32xf32, #tpu.memory_space<vmem>>, vector<2x8x32xf32>
    %c0_4 = arith.constant 0 : index
    %c0_5 = arith.constant 0 : index
    %2 = vector.load %arg3[%c0_4, %c0_5] : memref<2x8xf32, #tpu.memory_space<vmem>>, vector<2x8xf32>
    %c0_6 = arith.constant 0 : index
    %c0_7 = arith.constant 0 : index
    %3 = vector.load %arg4[%c0_6, %c0_7] : memref<32x32xf32, #tpu.memory_space<vmem>>, vector<32x32xf32>
    %cst = arith.constant dense<0.000000e+00> : vector<2x32xf32>
    %4 = tpu.matmul %0, %3, %cst {dimension_numbers = #tpu.dot_dimension_numbers<[1], [0], [0], [1], [0, 0, 1, 1], [], []>} : vector<2x32xf32>, vector<32x32xf32>, vector<2x32xf32> -> vector<2x32xf32>
    %c0_8 = arith.constant 0 : index
    %c0_9 = arith.constant 0 : index
    %5 = vector.load %arg5[%c0_8, %c0_9] : memref<1x32xf32, #tpu.memory_space<vmem>>, vector<1x32xf32>
    %6 = vector.broadcast %5 : vector<1x32xf32> to vector<2x32xf32>
    %7 = arith.addf %4, %6 : vector<2x32xf32>
    %8 = vector.shape_cast %7 : vector<2x32xf32> to vector<2x1x32xf32>
    %9 = vector.broadcast %8 : vector<2x1x32xf32> to vector<2x8x32xf32>
    %10 = arith.mulf %1, %9 : vector<2x8x32xf32>
    %cst_10 = arith.constant dense<0.000000e+00> : vector<2x8xf32>
    %11 = vector.multi_reduction <add>, %10, %cst_10 [2] : vector<2x8x32xf32> to vector<2x8xf32>
    %12 = arith.addf %11, %2 : vector<2x8xf32>
    %cst_11 = arith.constant dense<0xFF800000> : vector<2xf32>
    %13 = vector.multi_reduction <maximumf>, %12, %cst_11 [1] : vector<2x8xf32> to vector<2xf32>
    %14 = vector.shape_cast %13 : vector<2xf32> to vector<2x1xf32>
    %15 = vector.broadcast %14 : vector<2x1xf32> to vector<2x8xf32>
    %16 = arith.subf %12, %15 : vector<2x8xf32>
    %17 = math.exp %16 : vector<2x8xf32>
    %cst_12 = arith.constant dense<0.000000e+00> : vector<2xf32>
    %18 = vector.multi_reduction <add>, %17, %cst_12 [1] : vector<2x8xf32> to vector<2xf32>
    %19 = vector.shape_cast %18 : vector<2xf32> to vector<2x1xf32>
    %20 = tpu.reciprocal %19 {approx = true} : vector<2x1xf32> -> vector<2x1xf32>
    %21 = vector.broadcast %20 : vector<2x1xf32> to vector<2x8xf32>
    %22 = arith.mulf %17, %21 : vector<2x8xf32>
    %23 = vector.shape_cast %22 : vector<2x8xf32> to vector<2x8x1xf32>
    %24 = vector.broadcast %23 : vector<2x8x1xf32> to vector<2x8x32xf32>
    %25 = arith.mulf %24, %1 : vector<2x8x32xf32>
    %cst_13 = arith.constant dense<0.000000e+00> : vector<2x32xf32>
    %26 = vector.multi_reduction <add>, %25, %cst_13 [1] : vector<2x8x32xf32> to vector<2x32xf32>
    %c0_14 = arith.constant 0 : index
    %c0_15 = arith.constant 0 : index
    %27 = vector.load %arg6[%c0_14, %c0_15] : memref<32x32xf32, #tpu.memory_space<vmem>>, vector<32x32xf32>
    %cst_16 = arith.constant dense<0.000000e+00> : vector<2x32xf32>
    %28 = tpu.matmul %26, %27, %cst_16 {dimension_numbers = #tpu.dot_dimension_numbers<[1], [0], [0], [1], [0, 0, 1, 1], [], []>} : vector<2x32xf32>, vector<32x32xf32>, vector<2x32xf32> -> vector<2x32xf32>
    %c0_17 = arith.constant 0 : index
    %c0_18 = arith.constant 0 : index
    %29 = vector.load %arg7[%c0_17, %c0_18] : memref<1x32xf32, #tpu.memory_space<vmem>>, vector<1x32xf32>
    %30 = vector.broadcast %29 : vector<1x32xf32> to vector<2x32xf32>
    %31 = arith.addf %28, %30 : vector<2x32xf32>
    %c0_19 = arith.constant 0 : index
    %c0_20 = arith.constant 0 : index
    %32 = vector.load %arg8[%c0_19, %c0_20] : memref<2x32xf32, #tpu.memory_space<vmem>>, vector<2x32xf32>
    tpu.vector_store %arg8[%c0_19, %c0_20], %31 {strides = array<i32>} : memref<2x32xf32, #tpu.memory_space<vmem>>, vector<2x32xf32>,
    %c0_21 = arith.constant 0 : index
    %c0_22 = arith.constant 0 : index
    %33 = vector.load %arg9[%c0_21, %c0_22] : memref<2x8xf32, #tpu.memory_space<vmem>>, vector<2x8xf32>
    tpu.vector_store %arg9[%c0_21, %c0_22], %22 {strides = array<i32>} : memref<2x8xf32, #tpu.memory_space<vmem>>, vector<2x8xf32>,
    return
  }
  func.func @transform_0(%arg0: i32) -> (i32, i32) {
    %c0_i32 = arith.constant 0 : i32
    %c0_i32_0 = arith.constant 0 : i32
    return %arg0, %c0_i32 : i32, i32
  }
  func.func @transform_1(%arg0: i32) -> (i32, i32, i32) {
    %c0_i32 = arith.constant 0 : i32
    %c0_i32_0 = arith.constant 0 : i32
    %c0_i32_1 = arith.constant 0 : i32
    return %arg0, %c0_i32, %c0_i32_0 : i32, i32, i32
  }
  func.func @transform_2(%arg0: i32) -> (i32, i32) {
    %c0_i32 = arith.constant 0 : i32
    %c0_i32_0 = arith.constant 0 : i32
    return %arg0, %c0_i32 : i32, i32
  }
  func.func @transform_3(%arg0: i32) -> (i32, i32) {
    %c0_i32 = arith.constant 0 : i32
    %c0_i32_0 = arith.constant 0 : i32
    %c0_i32_1 = arith.constant 0 : i32
    return %c0_i32, %c0_i32_0 : i32, i32
  }
  func.func @transform_4(%arg0: i32) -> (i32, i32) {
    %c0_i32 = arith.constant 0 : i32
    %c0_i32_0 = arith.constant 0 : i32
    %c0_i32_1 = arith.constant 0 : i32
    return %c0_i32, %c0_i32_0 : i32, i32
  }
  func.func @transform_5(%arg0: i32) -> (i32, i32) {
    %c0_i32 = arith.constant 0 : i32
    %c0_i32_0 = arith.constant 0 : i32
    %c0_i32_1 = arith.constant 0 : i32
    return %c0_i32, %c0_i32_0 : i32, i32
  }
  func.func @transform_6(%arg0: i32) -> (i32, i32) {
    %c0_i32 = arith.constant 0 : i32
    %c0_i32_0 = arith.constant 0 : i32
    %c0_i32_1 = arith.constant 0 : i32
    return %c0_i32, %c0_i32_0 : i32, i32
  }
  func.func @transform_7(%arg0: i32) -> (i32, i32) {
    %c0_i32 = arith.constant 0 : i32
    %c0_i32_0 = arith.constant 0 : i32
    return %arg0, %c0_i32 : i32, i32
  }
  func.func @transform_8(%arg0: i32) -> (i32, i32) {
    %c0_i32 = arith.constant 0 : i32
    %c0_i32_0 = arith.constant 0 : i32
    return %arg0, %c0_i32 : i32, i32
  }
}

</mosaic_0001>

<llo_original>
// kernel: tpu_custom_call.1
$region0: #{tpu_custom_call.1}
  #allocation0 [shape = 'u32[]', space=smem, size = 0x4, offset = 0x4, fixed_abs, tag = 'smem constant byte address 0x4 - core index']
  #allocation1 [shape = 'u32[144,128]{1,0:T(1,128)}', space=vmem, size = 0x12000, scoped, tag = 'internal scratch']
  %s0 = inlined_call_operand.hbm [shape: f32[2,32], index: 0, kind: input, shape index: {}]
  %s1 = inlined_call_operand.hbm [shape: f32[2,8,32], index: 1, kind: input, shape index: {}]
  %s2 = inlined_call_operand.hbm [shape: f32[2,8], index: 2, kind: input, shape index: {}]
  %s3 = inlined_call_operand.hbm [shape: f32[32,32], index: 3, kind: input, shape index: {}]
  %s4 = inlined_call_operand.hbm [shape: f32[1,32], index: 4, kind: input, shape index: {}]
  %s5 = inlined_call_operand.hbm [shape: f32[32,32], index: 5, kind: input, shape index: {}]
  %s6 = inlined_call_operand.hbm [shape: f32[1,32], index: 6, kind: input, shape index: {}]
  %s7 = inlined_call_operand.hbm [shape: f32[2,32], index: 7, kind: output, shape index: {0}]
  %s8 = inlined_call_operand.hbm [shape: f32[2,8], index: 8, kind: output, shape index: {1}]
  %9 = xla_tuple %s7, %s8
  %s10 = sld [smem:[#allocation0]]
  $region74: #{tpu_custom_call.1} parent=0
    _
  %s12 = ssub.s32 1, %s10
  %s13 = scalar_select 0, %s12, %s10
  $region1: #{tpu_custom_call.1} parent=0
    #allocation2 [shape = 'u8[1024]{0}', space=vmem, size = 0x400, scoped, tag = 'input window, operand 0, single buffered']
    #allocation3 [shape = 's32[1]{0}', space=sflag, size = 0x4, scoped, tag = 'scoped memory for tpu_custom_call.1']
    #allocation4 [shape = 's32[1]{0}', space=sflag, size = 0x4, scoped, tag = 'scoped memory for tpu_custom_call.1']
    #allocation5 [shape = 'u8[8192]{0}', space=vmem, size = 0x2000, scoped, tag = 'input window, operand 1, single buffered']
    #allocation6 [shape = 's32[1]{0}', space=sflag, size = 0x4, scoped, tag = 'scoped memory for tpu_custom_call.1']
    #allocation7 [shape = 'u8[1024]{0}', space=vmem, size = 0x400, scoped, tag = 'input window, operand 2, single buffered']
    #allocation8 [shape = 'u8[16384]{0}', space=vmem, size = 0x4000, scoped, tag = 'input window, operand 3, single buffered']
    #allocation9 [shape = 's32[1]{0}', space=sflag, size = 0x4, scoped, tag = 'scoped memory for tpu_custom_call.1']
    #allocation10 [shape = 'u8[512]{0}', space=vmem, size = 0x400, scoped, tag = 'input window, operand 4, single buffered']
    #allocation11 [shape = 'u8[16384]{0}', space=vmem, size = 0x4000, scoped, tag = 'input window, operand 5, single buffered']
    #allocation12 [shape = 's32[1]{0}', space=sflag, size = 0x4, scoped, tag = 'scoped memory for tpu_custom_call.1']
    #allocation13 [shape = 'u8[512]{0}', space=vmem, size = 0x400, scoped, tag = 'input window, operand 6, single buffered']
    #allocation14 [shape = 'u8[1024]{0}', space=vmem, size = 0x400, scoped, tag = 'output window, operand 0, single buffered']
    #allocation15 [shape = 'u8[1024]{0}', space=vmem, size = 0x400, scoped, tag = 'output window, operand 1, single buffered']
    #allocation16 [shape = 's32[1]{0}', space=sflag, size = 0x4, scoped, tag = 'scoped memory for tpu_custom_call.1']
    %14 = vsyncpa [#allocation3], 0
    %15 = vsyncpa [#allocation6], 0
    %16 = vsyncpa [#allocation9], 0
    %17 = vsyncpa [#allocation12], 0
    %18 = vsyncpa [#allocation4], 0
    %19 = vsyncpa [#allocation16], 0
    // Predicated region
    $region2: #{tpu_custom_call.1} parent=1 // pred_check
      _
    $region3: #{tpu_custom_call.1} parent=1 // pred_check_branch
      %21 = sbr.rel (0) target = $region5
    $region4: #{tpu_custom_call.1} parent=1 // pred_region
      %s23 = ssub.s32 32, 32
      %24 = vsyncadd [#allocation3], %s23
      %s26 = sshll.u32 [#allocation2], 4
      %s27 = int_to_ptr.vmem [resolvable:$true] %s26
      %29 = dma.hbm_to_vmem [thread:$0]  %s0, 32, %s27, [#allocation3]
    $region5: #{tpu_custom_call.1} parent=1 // pred_fallthru
      _
    // Predicated region
    $region6: #{tpu_custom_call.1} parent=1 // pred_check
      _
    $region7: #{tpu_custom_call.1} parent=1 // pred_check_branch
      %31 = sbr.rel (0) target = $region9
    $region8: #{tpu_custom_call.1} parent=1 // pred_region
      %s33 = ssub.s32 256, 256
      %34 = vsyncadd [#allocation6], %s33
      %s35 = sshll.u32 [#allocation5], 4
      %s36 = int_to_ptr.vmem [resolvable:$true] %s35
      %41 = dma.hbm_to_vmem [thread:$0]  %s1, 256, %s36, [#allocation6], 128, 128, 8
    $region9: #{tpu_custom_call.1} parent=1 // pred_fallthru
      _
    // Predicated region
    $region10: #{tpu_custom_call.1} parent=1 // pred_check
      _
    $region11: #{tpu_custom_call.1} parent=1 // pred_check_branch
      %43 = sbr.rel (0) target = $region13
    $region12: #{tpu_custom_call.1} parent=1 // pred_region
      %s45 = ssub.s32 32, 32
      %46 = vsyncadd [#allocation6], %s45
      %s48 = sshll.u32 [#allocation7], 4
      %s49 = int_to_ptr.vmem [resolvable:$true] %s48
      %51 = dma.hbm_to_vmem [thread:$0]  %s2, 32, %s49, [#allocation6]
    $region13: #{tpu_custom_call.1} parent=1 // pred_fallthru
      _
    // Predicated region
    $region14: #{tpu_custom_call.1} parent=1 // pred_check
      _
    $region15: #{tpu_custom_call.1} parent=1 // pred_check_branch
      %53 = sbr.rel (0) target = $region17
    $region16: #{tpu_custom_call.1} parent=1 // pred_region
      %s55 = ssub.s32 512, 512
      %56 = vsyncadd [#allocation9], %s55
      %s57 = sshll.u32 [#allocation8], 4
      %s58 = int_to_ptr.vmem [resolvable:$true] %s57
      %63 = dma.hbm_to_vmem [thread:$0]  %s3, 512, %s58, [#allocation9], 128, 128, 8
    $region17: #{tpu_custom_call.1} parent=1 // pred_fallthru
      _
    // Predicated region
    $region18: #{tpu_custom_call.1} parent=1 // pred_check
      _
    $region19: #{tpu_custom_call.1} parent=1 // pred_check_branch
      %65 = sbr.rel (0) target = $region21
    $region20: #{tpu_custom_call.1} parent=1 // pred_region
      %s67 = ssub.s32 16, 16
      %68 = vsyncadd [#allocation9], %s67
      %s70 = sshll.u32 [#allocation10], 4
      %s71 = int_to_ptr.vmem [resolvable:$true] %s70
      %73 = dma.hbm_to_vmem [thread:$0]  %s4, 16, %s71, [#allocation9]
    $region21: #{tpu_custom_call.1} parent=1 // pred_fallthru
      _
    // Predicated region
    $region22: #{tpu_custom_call.1} parent=1 // pred_check
      _
    $region23: #{tpu_custom_call.1} parent=1 // pred_check_branch
      %75 = sbr.rel (0) target = $region25
    $region24: #{tpu_custom_call.1} parent=1 // pred_region
      %s77 = ssub.s32 512, 512
      %78 = vsyncadd [#allocation12], %s77
      %s79 = sshll.u32 [#allocation11], 4
      %s80 = int_to_ptr.vmem [resolvable:$true] %s79
      %85 = dma.hbm_to_vmem [thread:$0]  %s5, 512, %s80, [#allocation12], 128, 128, 8
    $region25: #{tpu_custom_call.1} parent=1 // pred_fallthru
      _
    // Predicated region
    $region26: #{tpu_custom_call.1} parent=1 // pred_check
      _
    $region27: #{tpu_custom_call.1} parent=1 // pred_check_branch
      %87 = sbr.rel (0) target = $region29
    $region28: #{tpu_custom_call.1} parent=1 // pred_region
      %s89 = ssub.s32 16, 16
      %90 = vsyncadd [#allocation12], %s89
      %s92 = sshll.u32 [#allocation13], 4
      %s93 = int_to_ptr.vmem [resolvable:$true] %s92
      %95 = dma.hbm_to_vmem [thread:$0]  %s6, 16, %s93, [#allocation12]
    $region29: #{tpu_custom_call.1} parent=1 // pred_fallthru
      _
    // Predicated region
    $region30: #{tpu_custom_call.1} parent=1 // pred_check
      _
    $region31: #{tpu_custom_call.1} parent=1 // pred_check_branch
      %97 = sbr.rel (0) target = $region33
    $region32: #{tpu_custom_call.1} parent=1 // pred_region
      %98 = dma.done [#allocation3], 32
    $region33: #{tpu_custom_call.1} parent=1 // pred_fallthru
      _
    // Predicated region
    $region34: #{tpu_custom_call.1} parent=1 // pred_check
      _
    $region35: #{tpu_custom_call.1} parent=1 // pred_check_branch
      %100 = sbr.rel (0) target = $region37
    $region36: #{tpu_custom_call.1} parent=1 // pred_region
      %101 = dma.done [#allocation6], 256
    $region37: #{tpu_custom_call.1} parent=1 // pred_fallthru
      _
    // Predicated region
    $region38: #{tpu_custom_call.1} parent=1 // pred_check
      _
    $region39: #{tpu_custom_call.1} parent=1 // pred_check_branch
      %103 = sbr.rel (0) target = $region41
    $region40: #{tpu_custom_call.1} parent=1 // pred_region
      %104 = dma.done [#allocation6], 32
    $region41: #{tpu_custom_call.1} parent=1 // pred_fallthru
      _
    // Predicated region
    $region42: #{tpu_custom_call.1} parent=1 // pred_check
      _
    $region43: #{tpu_custom_call.1} parent=1 // pred_check_branch
      %106 = sbr.rel (0) target = $region45
    $region44: #{tpu_custom_call.1} parent=1 // pred_region
      %107 = dma.done [#allocation9], 512
    $region45: #{tpu_custom_call.1} parent=1 // pred_fallthru
      _
    // Predicated region
    $region46: #{tpu_custom_call.1} parent=1 // pred_check
      _
    $region47: #{tpu_custom_call.1} parent=1 // pred_check_branch
      %109 = sbr.rel (0) target = $region49
    $region48: #{tpu_custom_call.1} parent=1 // pred_region
      %110 = dma.done [#allocation9], 16
    $region49: #{tpu_custom_call.1} parent=1 // pred_fallthru
      _
    // Predicated region
    $region50: #{tpu_custom_call.1} parent=1 // pred_check
      _
    $region51: #{tpu_custom_call.1} parent=1 // pred_check_branch
      %112 = sbr.rel (0) target = $region53
    $region52: #{tpu_custom_call.1} parent=1 // pred_region
      %113 = dma.done [#allocation12], 512
    $region53: #{tpu_custom_call.1} parent=1 // pred_fallthru
      _
    // Predicated region
    $region54: #{tpu_custom_call.1} parent=1 // pred_check
      _
    $region55: #{tpu_custom_call.1} parent=1 // pred_check_branch
      %115 = sbr.rel (0) target = $region57
    $region56: #{tpu_custom_call.1} parent=1 // pred_region
      %116 = dma.done [#allocation12], 16
    $region57: #{tpu_custom_call.1} parent=1 // pred_fallthru
      _
    %v117 = vld [vmem:[#allocation2] sm:$0x3]
    %v118 = vld [vmem:[#allocation5] sm:$0xff]
    %v119 = vld [vmem:[#allocation5 + $0x8] sm:$0xff]
    %v120 = vld [vmem:[#allocation7] sm:$0x3]
    %v121 = vld [vmem:[#allocation8] sm:$0xff]
    %v122 = vld [vmem:[#allocation8 + $0x8] sm:$0xff]
    %v123 = vld [vmem:[#allocation8 + $0x10] sm:$0xff]
    %v124 = vld [vmem:[#allocation8 + $0x18] sm:$0xff]
    %v125 = vld [vmem:[#allocation10] sm:$0x1]
    %v127 = vlaneseq
    %v128 = vshrl.u32 %v127, 7
    %v129 = vsub.s32 0, %v128
    %v130 = vrot.slane %v125, %v129
    %vm132 = vcmask 261120
    %v134 = vsel %vm132, %v117, 0
    %136 = vmatprep.subr.mxu0 0.0
    %137 = vmatpush1.msra.mxu0 %v121
    %138 = vmatprep.subr.mxu0 0.0
    %139 = vmatpush1.msra.mxu0 %v122
    %140 = vmatprep.subr.mxu0 0.0
    %141 = vmatpush1.msra.mxu0 %v123
    %142 = vmatprep.subr.mxu0 0.0
    %143 = vmatpush1.msra.mxu0 %v124
    %144 = vmatprep.subr.mxu0 0.0
    %145 = vmatpush1.msra.mxu0 0.0
    %146 = vmatprep.subr.mxu0 0.0
    %147 = vmatpush1.msra.mxu0 0.0
    %148 = vmatprep.subr.mxu0 0.0
    %149 = vmatpush1.msra.mxu0 0.0
    %150 = vmatprep.subr.mxu0 0.0
    %151 = vmatpush1.msra.mxu0 0.0
    %152 = vmatprep.subr.mxu0 0.0
    %153 = vmatpush1.msra.mxu0 0.0
    %154 = vmatprep.subr.mxu0 0.0
    %155 = vmatpush1.msra.mxu0 0.0
    %156 = vmatprep.subr.mxu0 0.0
    %157 = vmatpush1.msra.mxu0 0.0
    %158 = vmatprep.subr.mxu0 0.0
    %159 = vmatpush1.msra.mxu0 0.0
    %160 = vmatprep.subr.mxu0 0.0
    %161 = vmatpush1.msra.mxu0 0.0
    %162 = vmatprep.subr.mxu0 0.0
    %163 = vmatpush1.msra.mxu0 0.0
    %164 = vmatprep.subr.mxu0 0.0
    %165 = vmatpush1.msra.mxu0 0.0
    %166 = vmatprep.subr.mxu0 0.0
    %167 = vmatpush1.msra.mxu0 0.0
    %168 = vmatprep.subr.mxu0 0.0
    %169 = vmatpush1.msra.mxu0 0.0
    %170 = vmatprep.subr.mxu0 0.0
    %171 = vmatpush1.msra.mxu0 0.0
    %172 = vmatprep.subr.mxu0 0.0
    %173 = vmatpush1.msra.mxu0 0.0
    %174 = vmatprep.subr.mxu0 0.0
    %175 = vmatpush1.msra.mxu0 0.0
    %176 = vmatprep.subr.mxu0 0.0
    %177 = vmatpush1.msra.mxu0 0.0
    %178 = vmatprep.subr.mxu0 0.0
    %179 = vmatpush1.msra.mxu0 0.0
    %180 = vmatprep.subr.mxu0 0.0
    %181 = vmatpush1.msra.mxu0 0.0
    %182 = vmatprep.subr.mxu0 0.0
    %183 = vmatpush1.msra.mxu0 0.0
    %184 = vmatprep.subr.mxu0 0.0
    %185 = vmatpush1.msra.mxu0 0.0
    %186 = vmatprep.subr.mxu0 0.0
    %187 = vmatpush1.msra.mxu0 0.0
    %188 = vmatprep.subr.mxu0 0.0
    %189 = vmatpush1.msra.mxu0 0.0
    %190 = vmatprep.subr.mxu0 0.0
    %191 = vmatpush1.msra.mxu0 0.0
    %192 = vmatprep.subr.mxu0 0.0
    %193 = vmatpush1.msra.mxu0 0.0
    %194 = vmatprep.subr.mxu0 0.0
    %195 = vmatpush1.msra.mxu0 0.0
    %196 = vmatprep.subr.mxu0 0.0
    %197 = vmatpush1.msra.mxu0 0.0
    %198 = vmatprep.subr.mxu0 0.0
    %199 = vmatpush1.msra.mxu0 0.0
    %200 = vmatprep.mubr.f32.mxu0 0.0
    %201 = vmatmul.mubr.f32.gmra.mrb[0].mxu0 %v134
    %v202 = vpop.f32.mrb[0].mxu0
    %v203 = vadd.f32 %v130, %v202
    %v204 = vpop.f32.mrb[0].mxu0
    %205 = vdwg.mxu0
    %v208 = vunpack.c.l.s4 1966171168
    %v209 = vunpack.c.0.s8 %v208
    %v210 = vlaneseq
    %v211 = vshrl.u32 %v210, 7
    %v212 = vsub.s32 %v209, %v211
    %v213 = vrot.slane %v203, %v212
    %v214 = vcombine.high %v213, %v213
    %v216 = vunpack.c.l.s4 1966171168
    %v217 = vunpack.c.0.s8 %v216
    %v218 = vlaneseq
    %v219 = vshrl.u32 %v218, 7
    %v220 = vsub.s32 %v217, %v219
    %v221 = vrot.slane %v213, %v220
    %v223 = vunpack.c.l.s4 1966171168
    %v224 = vunpack.c.0.s8 %v223
    %v225 = vlaneseq
    %v226 = vshrl.u32 %v225, 7
    %v227 = vsub.s32 %v224, %v226
    %v228 = vrot.slane %v214, %v227
    %v229 = vlaneseq
    %v230 = vshrl.u32 %v229, 7
    %v231 = vsub.s32 0, %v230
    %v232 = vrot.slane %v221, %v231
    %v233 = vlaneseq
    %v234 = vshrl.u32 %v233, 7
    %v235 = vsub.s32 0, %v234
    %v236 = vrot.slane %v228, %v235
    %v239 = vmul.f32 %v118, %v232
    %v240 = vmul.f32 %v119, %v236
    %v241 = vsel %vm132, %v239, 0.0
    %242 = vadd.xlane.f32.xlu0 %v241
    %v243 = vpop.xlane.xlu0 %242
    %v244 = vsel %vm132, %v240, 0.0
    %245 = vadd.xlane.f32.xlu0 %v244
    %v246 = vpop.xlane.xlu0 %245
    %v248 = vlaneseq
    %v249 = vshrl.u32 %v248, 7
    %v250 = vsub.s32 0, %v249
    %v251 = vrot.slane %v120, %v250
    %253 = vbcast.lane.b32.xlu0 %v251, 256
    %v254 = vpop.permute.xlu0 %253
    %v255 = vlaneseq
    %v256 = vshrl.u32 %v255, 7
    %v257 = vsub.s32 1, %v256
    %v258 = vrot.slane %v120, %v257
    %260 = vbcast.lane.b32.xlu0 %v258, 256
    %v261 = vpop.permute.xlu0 %260
    %v264 = vadd.f32 %v243, %v254
    %v265 = vadd.f32 %v246, %v261
    %268 = vset.pattern.permute.xlu0 0
    %269 = vperm.xlu0 %268, %v264
    %v270 = vpop.permute.xlu0 %269
    %271 = vset.pattern.permute.xlu0 0
    %272 = vperm.xlu0 %271, %v265
    %v273 = vpop.permute.xlu0 %272
    %v274 = vlaneseq
    %v275 = vand.u32 %v274, 127
    %v276 = vlaneseq
    %v277 = vshrl.u32 %v276, 7
    %v278 = vsub.s32 %v275, %v277
    %v279 = vrot.slane %v270, %v278
    %v280 = vlaneseq
    %v281 = vshrl.u32 %v280, 7
    %v282 = vsub.s32 %v275, %v281
    %v283 = vrot.slane %v273, %v282
    %vm284 = vcmask 1041409
    %v285 = vsel %vm284, %v283, %v279
    %vm287 = vcmask 58368
    %v288 = vsel %vm287, %v285, -inf
    %289 = vmax.xlane.f32.xlu0 %v288
    %v290 = vpop.xlane.xlu0 %289
    %v292 = vlaneseq
    %v293 = vshrl.u32 %v292, 7
    %v294 = vsub.s32 0, %v293
    %v295 = vrot.slane %v290, %v294
    %v296 = vlaneseq
    %v297 = vshrl.u32 %v296, 7
    %v298 = vsub.s32 1, %v297
    %v299 = vrot.slane %v290, %v298
    %v302 = vsub.f32 %v264, %v295
    %v303 = vsub.f32 %v265, %v299
    %v304 = vmul.f32 %v302, 1.442695
    %v305 = vpow.pop %v304
    %v306 = vmul.f32 %v303, 1.442695
    %v307 = vpow.pop %v306
    %310 = vset.pattern.permute.xlu0 0
    %311 = vperm.xlu0 %310, %v305
    %v312 = vpop.permute.xlu0 %311
    %313 = vset.pattern.permute.xlu0 0
    %314 = vperm.xlu0 %313, %v307
    %v315 = vpop.permute.xlu0 %314
    %v316 = vlaneseq
    %v317 = vshrl.u32 %v316, 7
    %v318 = vsub.s32 %v275, %v317
    %v319 = vrot.slane %v312, %v318
    %v320 = vlaneseq
    %v321 = vshrl.u32 %v320, 7
    %v322 = vsub.s32 %v275, %v321
    %v323 = vrot.slane %v315, %v322
    %v324 = vsel %vm284, %v323, %v319
    %v326 = vsel %vm287, %v324, 0.0
    %327 = vadd.xlane.f32.xlu0 %v326
    %v328 = vpop.xlane.xlu0 %327
    %v329 = vrcp.pop %v328
    %v331 = vlaneseq
    %v332 = vshrl.u32 %v331, 7
    %v333 = vsub.s32 0, %v332
    %v334 = vrot.slane %v329, %v333
    %v335 = vlaneseq
    %v336 = vshrl.u32 %v335, 7
    %v337 = vsub.s32 1, %v336
    %v338 = vrot.slane %v329, %v337
    %v341 = vmul.f32 %v305, %v334
    %v342 = vmul.f32 %v307, %v338
    %344 = vset.pattern.permute.xlu0 0
    %345 = vperm.xlu0 %344, %v341
    %v346 = vpop.permute.xlu0 %345
    %349 = vset.pattern.permute.xlu0 0
    %350 = vperm.xlu0 %349, %v342
    %v351 = vpop.permute.xlu0 %350
    %v353 = vmul.f32 %v346, %v118
    %v354 = vmul.f32 %v351, %v119
    %v355 = vsel %vm132, %v353, 0.0
    %v356 = vrot.slane %v355, 4
    %v357 = vadd.f32 %v355, %v356
    %v358 = vrot.slane %v357, 2
    %v359 = vadd.f32 %v357, %v358
    %v360 = vrot.slane %v359, 1
    %v361 = vadd.f32 %v359, %v360
    %v362 = vsel %vm132, %v354, 0.0
    %v363 = vrot.slane %v362, 4
    %v364 = vadd.f32 %v362, %v363
    %v365 = vrot.slane %v364, 2
    %v366 = vadd.f32 %v364, %v365
    %v367 = vrot.slane %v366, 1
    %v368 = vadd.f32 %v366, %v367
    %v369 = vld [vmem:[#allocation11] sm:$0xff]
    %v370 = vld [vmem:[#allocation11 + $0x8] sm:$0xff]
    %v371 = vld [vmem:[#allocation11 + $0x10] sm:$0xff]
    %v372 = vld [vmem:[#allocation11 + $0x18] sm:$0xff]
    %v373 = vld [vmem:[#allocation13] sm:$0x1]
    %v375 = vlaneseq
    %v376 = vshrl.u32 %v375, 7
    %v377 = vsub.s32 0, %v376
    %v378 = vrot.slane %v373, %v377
    %v382 = vsel %vm284, %v368, %v361
    %v383 = vsel %vm132, %v382, 0
    %385 = vmatprep.subr.mxu0 0.0
    %386 = vmatpush1.msra.mxu0 %v369
    %387 = vmatprep.subr.mxu0 0.0
    %388 = vmatpush1.msra.mxu0 %v370
    %389 = vmatprep.subr.mxu0 0.0
    %390 = vmatpush1.msra.mxu0 %v371
    %391 = vmatprep.subr.mxu0 0.0
    %392 = vmatpush1.msra.mxu0 %v372
    %393 = vmatprep.subr.mxu0 0.0
    %394 = vmatpush1.msra.mxu0 0.0
    %395 = vmatprep.subr.mxu0 0.0
    %396 = vmatpush1.msra.mxu0 0.0
    %397 = vmatprep.subr.mxu0 0.0
    %398 = vmatpush1.msra.mxu0 0.0
    %399 = vmatprep.subr.mxu0 0.0
    %400 = vmatpush1.msra.mxu0 0.0
    %401 = vmatprep.subr.mxu0 0.0
    %402 = vmatpush1.msra.mxu0 0.0
    %403 = vmatprep.subr.mxu0 0.0
    %404 = vmatpush1.msra.mxu0 0.0
    %405 = vmatprep.subr.mxu0 0.0
    %406 = vmatpush1.msra.mxu0 0.0
    %407 = vmatprep.subr.mxu0 0.0
    %408 = vmatpush1.msra.mxu0 0.0
    %409 = vmatprep.subr.mxu0 0.0
    %410 = vmatpush1.msra.mxu0 0.0
    %411 = vmatprep.subr.mxu0 0.0
    %412 = vmatpush1.msra.mxu0 0.0
    %413 = vmatprep.subr.mxu0 0.0
    %414 = vmatpush1.msra.mxu0 0.0
    %415 = vmatprep.subr.mxu0 0.0
    %416 = vmatpush1.msra.mxu0 0.0
    %417 = vmatprep.subr.mxu0 0.0
    %418 = vmatpush1.msra.mxu0 0.0
    %419 = vmatprep.subr.mxu0 0.0
    %420 = vmatpush1.msra.mxu0 0.0
    %421 = vmatprep.subr.mxu0 0.0
    %422 = vmatpush1.msra.mxu0 0.0
    %423 = vmatprep.subr.mxu0 0.0
    %424 = vmatpush1.msra.mxu0 0.0
    %425 = vmatprep.subr.mxu0 0.0
    %426 = vmatpush1.msra.mxu0 0.0
    %427 = vmatprep.subr.mxu0 0.0
    %428 = vmatpush1.msra.mxu0 0.0
    %429 = vmatprep.subr.mxu0 0.0
    %430 = vmatpush1.msra.mxu0 0.0
    %431 = vmatprep.subr.mxu0 0.0
    %432 = vmatpush1.msra.mxu0 0.0
    %433 = vmatprep.subr.mxu0 0.0
    %434 = vmatpush1.msra.mxu0 0.0
    %435 = vmatprep.subr.mxu0 0.0
    %436 = vmatpush1.msra.mxu0 0.0
    %437 = vmatprep.subr.mxu0 0.0
    %438 = vmatpush1.msra.mxu0 0.0
    %439 = vmatprep.subr.mxu0 0.0
    %440 = vmatpush1.msra.mxu0 0.0
    %441 = vmatprep.subr.mxu0 0.0
    %442 = vmatpush1.msra.mxu0 0.0
    %443 = vmatprep.subr.mxu0 0.0
    %444 = vmatpush1.msra.mxu0 0.0
    %445 = vmatprep.subr.mxu0 0.0
    %446 = vmatpush1.msra.mxu0 0.0
    %447 = vmatprep.subr.mxu0 0.0
    %448 = vmatpush1.msra.mxu0 0.0
    %449 = vmatprep.mubr.f32.mxu0 0.0
    %450 = vmatmul.mubr.f32.gmra.mrb[0].mxu0 %v383
    %v451 = vpop.f32.mrb[0].mxu0
    %v452 = vadd.f32 %v378, %v451
    %v453 = vpop.f32.mrb[0].mxu0
    %454 = vdwg.mxu0
    %vm455 = vcmask 254976
    %456 = vst.msk [vmem:[#allocation14] sm:$0x3] %vm455, %v452
    %v457 = vlaneseq
    %v458 = vshrl.u32 %v457, 7
    %v459 = vsub.s32 %v275, %v458
    %v460 = vrot.slane %v346, %v459
    %v461 = vlaneseq
    %v462 = vshrl.u32 %v461, 7
    %v463 = vsub.s32 %v275, %v462
    %v464 = vrot.slane %v351, %v463
    %v465 = vsel %vm284, %v464, %v460
    %467 = vst.msk [vmem:[#allocation15] sm:$0x3] %vm287, %v465
    // Predicated region
    $region58: #{tpu_custom_call.1} parent=1 // pred_check
      _
    $region59: #{tpu_custom_call.1} parent=1 // pred_check_branch
      %469 = sbr.rel (0) target = $region61
    $region60: #{tpu_custom_call.1} parent=1 // pred_region
      %s471 = ssub.s32 32, 32
      %472 = vsyncadd [#allocation4], %s471
      %s474 = sshll.u32 [#allocation14], 4
      %s475 = int_to_ptr.vmem [resolvable:$true] %s474
      %477 = dma.vmem_to_hbm [thread:$0]  %s475, 32, %s7, [#allocation4]
    $region61: #{tpu_custom_call.1} parent=1 // pred_fallthru
      _
    // Predicated region
    $region62: #{tpu_custom_call.1} parent=1 // pred_check
      _
    $region63: #{tpu_custom_call.1} parent=1 // pred_check_branch
      %479 = sbr.rel (0) target = $region65
    $region64: #{tpu_custom_call.1} parent=1 // pred_region
      %s481 = ssub.s32 32, 32
      %482 = vsyncadd [#allocation16], %s481
      %s484 = sshll.u32 [#allocation15], 4
      %s485 = int_to_ptr.vmem [resolvable:$true] %s484
      %487 = dma.vmem_to_hbm [thread:$0]  %s485, 32, %s8, [#allocation16]
    $region65: #{tpu_custom_call.1} parent=1 // pred_fallthru
      _
    // Predicated region
    $region66: #{tpu_custom_call.1} parent=1 // pred_check
      _
    $region67: #{tpu_custom_call.1} parent=1 // pred_check_branch
      %489 = sbr.rel (0) target = $region69
    $region68: #{tpu_custom_call.1} parent=1 // pred_region
      %490 = dma.done [#allocation4], 32
    $region69: #{tpu_custom_call.1} parent=1 // pred_fallthru
      _
    // Predicated region
    $region70: #{tpu_custom_call.1} parent=1 // pred_check
      _
    $region71: #{tpu_custom_call.1} parent=1 // pred_check_branch
      %492 = sbr.rel (0) target = $region73
    $region72: #{tpu_custom_call.1} parent=1 // pred_region
      %493 = dma.done [#allocation16], 32
    $region73: #{tpu_custom_call.1} parent=1 // pred_fallthru
      _
    %494 = vsyncpa [#allocation3], 1
    %495 = vsyncpa [#allocation6], 1
    %496 = vsyncpa [#allocation9], 1
    %497 = vsyncpa [#allocation12], 1
    %498 = vsyncpa [#allocation4], 1
    %499 = vsyncpa [#allocation16], 1

</llo_original>
